<compile_context>
chip_gen: v6e
topology: v6e:2x2x1
jax: 0.10.0
libtpu: 0.0.40
codegen_flags: <defaults>
</compile_context>

<pallas_src>
import functools

import jax
import jax.numpy as jnp
from jax.experimental import pallas as pl
from jax.experimental.pallas import tpu as pltpu

HIDDEN = 176  # hidden width used by both MLPs in the PyTorch module


def _round_up(n, m):
    return (n + m - 1) // m * m


# ----------------------------------------------------------------------------
# Kernel: both 3-layer MLPs (F and Phi) + latent-dim dot product, fused.
# One grid step processes one batch tile; weights are VMEM-resident.
# ----------------------------------------------------------------------------
def bvn_critic_kernel(
    x_ref, a_ref,
    fw1x_ref, fw1a_ref, fb1_ref, fw2_ref, fb2_ref, fw3_ref, fb3_ref,
    pw1_ref, pb1_ref, pw2_ref, pb2_ref, pw3_ref, pb3_ref,
    q_ref,
):
    f32 = jnp.float32
    bf16 = jnp.bfloat16

    x = x_ref[...]      # [TILE_B, obs + goal], bf16
    a = a_ref[...]      # [TILE_B, action],     bf16

    # ---- F branch: F_in = [s | actions/max_action] is folded into weights:
    #      x @ fw1x (goal rows of fw1x are zero) + a @ fw1a (scale folded in).
    h = jnp.dot(x, fw1x_ref[...], preferred_element_type=f32)
    h = h + jnp.dot(a, fw1a_ref[...], preferred_element_type=f32)
    h = jnp.maximum(h + fb1_ref[...], 0.0)
    h = jnp.dot(h.astype(bf16), fw2_ref[...], preferred_element_type=f32) + fb2_ref[...]
    h = jnp.maximum(h, 0.0)
    f_out = jnp.dot(h.astype(bf16), fw3_ref[...], preferred_element_type=f32) + fb3_ref[...]

    # ---- Phi branch: Phi_in = [s | g] == x, no assembly needed.
    h = jnp.dot(x, pw1_ref[...], preferred_element_type=f32) + pb1_ref[...]
    h = jnp.maximum(h, 0.0)
    h = jnp.dot(h.astype(bf16), pw2_ref[...], preferred_element_type=f32) + pb2_ref[...]
    h = jnp.maximum(h, 0.0)
    p_out = jnp.dot(h.astype(bf16), pw3_ref[...], preferred_element_type=f32) + pb3_ref[...]

    # torch.matmul(F_out^T, Phi_out) per batch row == per-row latent dot.
    q_ref[...] = jnp.sum(f_out * p_out, axis=-1, keepdims=True)


# ----------------------------------------------------------------------------
# Parameter preprocessing: bf16 weights, f32 biases, input assembly folded in.
# ----------------------------------------------------------------------------
def _prepare_kernel_params(params, *, obs, goal, max_action):
    (fw1, fb1), (fw2, fb2), (fw3, fb3) = params["F"]
    (pw1, pb1), (pw2, pb2), (pw3, pb3) = params["Phi"]
    bf16 = jnp.bfloat16
    f32 = jnp.float32
    hidden = fw1.shape[1]

    # F layer 1: observation rows are fed by x ([s | g], goal rows zeroed so
    # they contribute nothing), action rows are fed by actions with the
    # 1/max_action scale folded into the weights.
    fw1x = jnp.concatenate([fw1[:obs], jnp.zeros((goal, hidden), fw1.dtype)], axis=0)
    fw1a = fw1[obs:] / max_action

    return (
        fw1x.astype(bf16), fw1a.astype(bf16), fb1.astype(f32),
        fw2.astype(bf16), fb2.astype(f32),
        fw3.astype(bf16), fb3.astype(f32),
        pw1.astype(bf16), pb1.astype(f32),
        pw2.astype(bf16), pb2.astype(f32),
        pw3.astype(bf16), pb3.astype(f32),
    )


# ----------------------------------------------------------------------------
# Wrapper
# ----------------------------------------------------------------------------
@functools.partial(jax.jit, static_argnames=("goal_dim", "max_action", "tile_b"))
def bvn_critic_forward(x, actions, params, *, goal_dim, max_action, tile_b=512):
    """x: [B, obs + goal], actions: [B, action] -> q: [B, 1]."""
    batch, obs_goal = x.shape
    action_dim = actions.shape[1]
    obs = obs_goal - goal_dim

    kp = _prepare_kernel_params(params, obs=obs, goal=goal_dim, max_action=max_action)

    # Batch tiling: multiple of 8 sublanes; pad batch so it divides evenly.
    tile_b = min(tile_b, _round_up(batch, 8))
    padded = _round_up(batch, tile_b)
    pad = padded - batch

    x_b = x.astype(jnp.bfloat16)
    a_b = actions.astype(jnp.bfloat16)
    if pad:
        x_b = jnp.pad(x_b, ((0, pad), (0, 0)))
        a_b = jnp.pad(a_b, ((0, pad), (0, 0)))

    grid = (padded // tile_b,)

    def act_spec(feat):
        # per-grid-step batch tile (auto double-buffered by Pallas)
        return pl.BlockSpec((tile_b, feat), lambda i: (i, 0))

    def resident_spec(arr):
        # full-array block, constant index -> DMA'd once, stays in VMEM
        return pl.BlockSpec(arr.shape, lambda i: (0, 0))

    in_specs = [act_spec(obs_goal), act_spec(action_dim)] + [resident_spec(w) for w in kp]

    q = pl.pallas_call(
        bvn_critic_kernel,
        out_shape=jax.ShapeDtypeStruct((padded, 1), jnp.float32),
        grid=grid,
        in_specs=in_specs,
        out_specs=pl.BlockSpec((tile_b, 1), lambda i: (i, 0)),
        compiler_params=pltpu.CompilerParams(
            dimension_semantics=("parallel",),
            vmem_limit_bytes=32 * 1024 * 1024,
        ),
    )(x_b, a_b, *kp)
    return q[:batch]


# ----------------------------------------------------------------------------
# Deterministic parameter construction (PyTorch-Linear-style uniform init),
# weights stored as [in, out], biases as [1, out], all f32.
# ----------------------------------------------------------------------------
def make_params(key, obs, goal, action, latent_dim):
    def linear(key, fan_in, fan_out):
        kw, kb = jax.random.split(key)
        bound = 1.0 / jnp.sqrt(jnp.float32(fan_in))
        w = jax.random.uniform(kw, (fan_in, fan_out), jnp.float32, -bound, bound)
        b = jax.random.uniform(kb, (1, fan_out), jnp.float32, -bound, bound)
        return w, b

    keys = jax.random.split(key, 6)
    return {
        "F": [
            linear(keys[0], obs + action, HIDDEN),
            linear(keys[1], HIDDEN, HIDDEN),
            linear(keys[2], HIDDEN, latent_dim),
        ],
        "Phi": [
            linear(keys[3], obs + goal, HIDDEN),
            linear(keys[4], HIDDEN, HIDDEN),
            linear(keys[5], HIDDEN, latent_dim),
        ],
    }


# ----------------------------------------------------------------------------
# References.
# ----------------------------------------------------------------------------
def reference_forward_f32(x, actions, params, *, goal_dim, max_action):
    """Pure f32 reference matching the PyTorch module exactly."""
    g = x[:, -goal_dim:]
    s = x[:, :-goal_dim]
    f_in = jnp.concatenate([s, actions / max_action], axis=1)
    phi_in = jnp.concatenate([s, g], axis=1)

    def mlp(z, layers):
        (w1, b1), (w2, b2), (w3, b3) = layers
        h = jnp.maximum(z @ w1 + b1, 0.0)
        h = jnp.maximum(h @ w2 + b2, 0.0)
        return h @ w3 + b3

    f_out = mlp(f_in, params["F"])
    phi_out = mlp(phi_in, params["Phi"])
    return jnp.sum(f_out * phi_out, axis=-1, keepdims=True)


def reference_forward_kernel_math(x, actions, params, *, goal_dim, max_action):
    """Pure-JAX reference reproducing the kernel's bf16-operand / f32-accumulate math."""
    obs = x.shape[1] - goal_dim
    (fw1x, fw1a, fb1, fw2, fb2, fw3, fb3,
     pw1, pb1, pw2, pb2, pw3, pb3) = _prepare_kernel_params(
        params, obs=obs, goal=goal_dim, max_action=max_action)
    f32, bf16 = jnp.float32, jnp.bfloat16
    xb = x.astype(bf16)
    ab = actions.astype(bf16)

    h = jnp.dot(xb, fw1x, preferred_element_type=f32)
    h = h + jnp.dot(ab, fw1a, preferred_element_type=f32)
    h = jnp.maximum(h + fb1, 0.0)
    h = jnp.maximum(jnp.dot(h.astype(bf16), fw2, preferred_element_type=f32) + fb2, 0.0)
    f_out = jnp.dot(h.astype(bf16), fw3, preferred_element_type=f32) + fb3

    h = jnp.maximum(jnp.dot(xb, pw1, preferred_element_type=f32) + pb1, 0.0)
    h = jnp.maximum(jnp.dot(h.astype(bf16), pw2, preferred_element_type=f32) + pb2, 0.0)
    p_out = jnp.dot(h.astype(bf16), pw3, preferred_element_type=f32) + pb3

    return jnp.sum(f_out * p_out, axis=-1, keepdims=True)


if __name__ == "__main__":
    # Small env_params-consistent shapes.
    obs, goal, action = 10, 3, 4
    latent_dim = 16
    max_action = 1.0

    key = jax.random.PRNGKey(0)
    k_params, k_x, k_a, k_x2, k_a2 = jax.random.split(key, 5)
    params = make_params(k_params, obs, goal, action, latent_dim)

    # --- check 1: tiny batch (single grid step) ---
    batch = 8
    x = jax.random.normal(k_x, (batch, obs + goal), jnp.float32)
    actions = jax.random.normal(k_a, (batch, action), jnp.float32)

    q = bvn_critic_forward(x, actions, params, goal_dim=goal, max_action=max_action)
    q = jax.block_until_ready(q)
    assert q.shape == (batch, 1)

    q_kmath = reference_forward_kernel_math(x, actions, params,
                                            goal_dim=goal, max_action=max_action)
    q_f32 = reference_forward_f32(x, actions, params,
                                  goal_dim=goal, max_action=max_action)
    assert jnp.allclose(q, q_kmath, atol=1e-4, rtol=1e-4)       # exact kernel math
    assert jnp.allclose(q, q_f32, atol=1e-1, rtol=1e-1)         # bf16-vs-f32 sanity

    # --- check 2: batch not a multiple of the tile, multi-step grid ---
    batch2 = 20
    x2 = jax.random.normal(k_x2, (batch2, obs + goal), jnp.float32)
    a2 = jax.random.normal(k_a2, (batch2, action), jnp.float32)
    q2 = bvn_critic_forward(x2, a2, params, goal_dim=goal, max_action=max_action,
                            tile_b=8)
    q2 = jax.block_until_ready(q2)
    q2_kmath = reference_forward_kernel_math(x2, a2, params,
                                             goal_dim=goal, max_action=max_action)
    assert q2.shape == (batch2, 1)
    assert jnp.allclose(q2, q2_kmath, atol=1e-4, rtol=1e-4)

    print("KERNEL_OK")
</pallas_src>

<mosaic_0001>
module attributes {stable_mosaic.version = 11 : i64} {
  func.func @bvn_critic_kernel(%arg0: i32, %arg1: memref<8x13xbf16, #tpu.memory_space<vmem>>, %arg2: memref<8x4xbf16, #tpu.memory_space<vmem>>, %arg3: memref<13x176xbf16, #tpu.memory_space<vmem>>, %arg4: memref<4x176xbf16, #tpu.memory_space<vmem>>, %arg5: memref<1x176xf32, #tpu.memory_space<vmem>>, %arg6: memref<176x176xbf16, #tpu.memory_space<vmem>>, %arg7: memref<1x176xf32, #tpu.memory_space<vmem>>, %arg8: memref<176x16xbf16, #tpu.memory_space<vmem>>, %arg9: memref<1x16xf32, #tpu.memory_space<vmem>>, %arg10: memref<13x176xbf16, #tpu.memory_space<vmem>>, %arg11: memref<1x176xf32, #tpu.memory_space<vmem>>, %arg12: memref<176x176xbf16, #tpu.memory_space<vmem>>, %arg13: memref<1x176xf32, #tpu.memory_space<vmem>>, %arg14: memref<176x16xbf16, #tpu.memory_space<vmem>>, %arg15: memref<1x16xf32, #tpu.memory_space<vmem>>, %arg16: memref<8x1xf32, #tpu.memory_space<vmem>>) attributes {dimension_semantics = [#tpu.dimension_semantics<parallel>], iteration_bounds = array<i64: 1>, scalar_prefetch = 0 : i64, scratch_operands = 0 : i64, tpu.core_type = #tpu.core_type<tc>, window_params = [{transform_indices = @transform_0, window_bounds = array<i64: 8, 13>}, {transform_indices = @transform_1, window_bounds = array<i64: 8, 4>}, {pipeline_mode = #tpu.pipeline_mode<synchronous>, transform_indices = @transform_2, window_bounds = array<i64: 13, 176>}, {pipeline_mode = #tpu.pipeline_mode<synchronous>, transform_indices = @transform_3, window_bounds = array<i64: 4, 176>}, {pipeline_mode = #tpu.pipeline_mode<synchronous>, transform_indices = @transform_4, window_bounds = array<i64: 1, 176>}, {pipeline_mode = #tpu.pipeline_mode<synchronous>, transform_indices = @transform_5, window_bounds = array<i64: 176, 176>}, {pipeline_mode = #tpu.pipeline_mode<synchronous>, transform_indices = @transform_6, window_bounds = array<i64: 1, 176>}, {pipeline_mode = #tpu.pipeline_mode<synchronous>, transform_indices = @transform_7, window_bounds = array<i64: 176, 16>}, {pipeline_mode = #tpu.pipeline_mode<synchronous>, transform_indices = @transform_8, window_bounds = array<i64: 1, 16>}, {pipeline_mode = #tpu.pipeline_mode<synchronous>, transform_indices = @transform_9, window_bounds = array<i64: 13, 176>}, {pipeline_mode = #tpu.pipeline_mode<synchronous>, transform_indices = @transform_10, window_bounds = array<i64: 1, 176>}, {pipeline_mode = #tpu.pipeline_mode<synchronous>, transform_indices = @transform_11, window_bounds = array<i64: 176, 176>}, {pipeline_mode = #tpu.pipeline_mode<synchronous>, transform_indices = @transform_12, window_bounds = array<i64: 1, 176>}, {pipeline_mode = #tpu.pipeline_mode<synchronous>, transform_indices = @transform_13, window_bounds = array<i64: 176, 16>}, {pipeline_mode = #tpu.pipeline_mode<synchronous>, transform_indices = @transform_14, window_bounds = array<i64: 1, 16>}, {transform_indices = @transform_15, window_bounds = array<i64: 8, 1>}]} {
    %c0 = arith.constant 0 : index
    %c0_0 = arith.constant 0 : index
    %0 = vector.load %arg1[%c0, %c0_0] : memref<8x13xbf16, #tpu.memory_space<vmem>>, vector<8x13xbf16>
    %c0_1 = arith.constant 0 : index
    %c0_2 = arith.constant 0 : index
    %1 = vector.load %arg2[%c0_1, %c0_2] : memref<8x4xbf16, #tpu.memory_space<vmem>>, vector<8x4xbf16>
    %c0_3 = arith.constant 0 : index
    %c0_4 = arith.constant 0 : index
    %2 = vector.load %arg3[%c0_3, %c0_4] : memref<13x176xbf16, #tpu.memory_space<vmem>>, vector<13x176xbf16>
    %cst = arith.constant dense<0.000000e+00> : vector<8x176xf32>
    %3 = tpu.matmul %0, %2, %cst {dimension_numbers = #tpu.dot_dimension_numbers<[1], [0], [0], [1], [0, 0, 1, 1], [], []>} : vector<8x13xbf16>, vector<13x176xbf16>, vector<8x176xf32> -> vector<8x176xf32>
    %c0_5 = arith.constant 0 : index
    %c0_6 = arith.constant 0 : index
    %4 = vector.load %arg4[%c0_5, %c0_6] : memref<4x176xbf16, #tpu.memory_space<vmem>>, vector<4x176xbf16>
    %cst_7 = arith.constant dense<0.000000e+00> : vector<8x176xf32>
    %5 = tpu.matmul %1, %4, %cst_7 {dimension_numbers = #tpu.dot_dimension_numbers<[1], [0], [0], [1], [0, 0, 1, 1], [], []>} : vector<8x4xbf16>, vector<4x176xbf16>, vector<8x176xf32> -> vector<8x176xf32>
    %6 = arith.addf %3, %5 : vector<8x176xf32>
    %c0_8 = arith.constant 0 : index
    %c0_9 = arith.constant 0 : index
    %7 = vector.load %arg5[%c0_8, %c0_9] : memref<1x176xf32, #tpu.memory_space<vmem>>, vector<1x176xf32>
    %8 = vector.broadcast %7 : vector<1x176xf32> to vector<8x176xf32>
    %9 = arith.addf %6, %8 : vector<8x176xf32>
    %cst_10 = arith.constant 0.000000e+00 : f32
    %10 = vector.broadcast %cst_10 : f32 to vector<8x176xf32>
    %11 = arith.maximumf %9, %10 : vector<8x176xf32>
    %12 = arith.truncf %11 : vector<8x176xf32> to vector<8x176xbf16>
    %c0_11 = arith.constant 0 : index
    %c0_12 = arith.constant 0 : index
    %13 = vector.load %arg6[%c0_11, %c0_12] : memref<176x176xbf16, #tpu.memory_space<vmem>>, vector<176x176xbf16>
    %cst_13 = arith.constant dense<0.000000e+00> : vector<8x176xf32>
    %14 = tpu.matmul %12, %13, %cst_13 {dimension_numbers = #tpu.dot_dimension_numbers<[1], [0], [0], [1], [0, 0, 1, 1], [], []>} : vector<8x176xbf16>, vector<176x176xbf16>, vector<8x176xf32> -> vector<8x176xf32>
    %c0_14 = arith.constant 0 : index
    %c0_15 = arith.constant 0 : index
    %15 = vector.load %arg7[%c0_14, %c0_15] : memref<1x176xf32, #tpu.memory_space<vmem>>, vector<1x176xf32>
    %16 = vector.broadcast %15 : vector<1x176xf32> to vector<8x176xf32>
    %17 = arith.addf %14, %16 : vector<8x176xf32>
    %cst_16 = arith.constant 0.000000e+00 : f32
    %18 = vector.broadcast %cst_16 : f32 to vector<8x176xf32>
    %19 = arith.maximumf %17, %18 : vector<8x176xf32>
    %20 = arith.truncf %19 : vector<8x176xf32> to vector<8x176xbf16>
    %c0_17 = arith.constant 0 : index
    %c0_18 = arith.constant 0 : index
    %21 = vector.load %arg8[%c0_17, %c0_18] : memref<176x16xbf16, #tpu.memory_space<vmem>>, vector<176x16xbf16>
    %cst_19 = arith.constant dense<0.000000e+00> : vector<8x16xf32>
    %22 = tpu.matmul %20, %21, %cst_19 {dimension_numbers = #tpu.dot_dimension_numbers<[1], [0], [0], [1], [0, 0, 1, 1], [], []>} : vector<8x176xbf16>, vector<176x16xbf16>, vector<8x16xf32> -> vector<8x16xf32>
    %c0_20 = arith.constant 0 : index
    %c0_21 = arith.constant 0 : index
    %23 = vector.load %arg9[%c0_20, %c0_21] : memref<1x16xf32, #tpu.memory_space<vmem>>, vector<1x16xf32>
    %24 = vector.broadcast %23 : vector<1x16xf32> to vector<8x16xf32>
    %25 = arith.addf %22, %24 : vector<8x16xf32>
    %c0_22 = arith.constant 0 : index
    %c0_23 = arith.constant 0 : index
    %26 = vector.load %arg10[%c0_22, %c0_23] : memref<13x176xbf16, #tpu.memory_space<vmem>>, vector<13x176xbf16>
    %cst_24 = arith.constant dense<0.000000e+00> : vector<8x176xf32>
    %27 = tpu.matmul %0, %26, %cst_24 {dimension_numbers = #tpu.dot_dimension_numbers<[1], [0], [0], [1], [0, 0, 1, 1], [], []>} : vector<8x13xbf16>, vector<13x176xbf16>, vector<8x176xf32> -> vector<8x176xf32>
    %c0_25 = arith.constant 0 : index
    %c0_26 = arith.constant 0 : index
    %28 = vector.load %arg11[%c0_25, %c0_26] : memref<1x176xf32, #tpu.memory_space<vmem>>, vector<1x176xf32>
    %29 = vector.broadcast %28 : vector<1x176xf32> to vector<8x176xf32>
    %30 = arith.addf %27, %29 : vector<8x176xf32>
    %cst_27 = arith.constant 0.000000e+00 : f32
    %31 = vector.broadcast %cst_27 : f32 to vector<8x176xf32>
    %32 = arith.maximumf %30, %31 : vector<8x176xf32>
    %33 = arith.truncf %32 : vector<8x176xf32> to vector<8x176xbf16>
    %c0_28 = arith.constant 0 : index
    %c0_29 = arith.constant 0 : index
    %34 = vector.load %arg12[%c0_28, %c0_29] : memref<176x176xbf16, #tpu.memory_space<vmem>>, vector<176x176xbf16>
    %cst_30 = arith.constant dense<0.000000e+00> : vector<8x176xf32>
    %35 = tpu.matmul %33, %34, %cst_30 {dimension_numbers = #tpu.dot_dimension_numbers<[1], [0], [0], [1], [0, 0, 1, 1], [], []>} : vector<8x176xbf16>, vector<176x176xbf16>, vector<8x176xf32> -> vector<8x176xf32>
    %c0_31 = arith.constant 0 : index
    %c0_32 = arith.constant 0 : index
    %36 = vector.load %arg13[%c0_31, %c0_32] : memref<1x176xf32, #tpu.memory_space<vmem>>, vector<1x176xf32>
    %37 = vector.broadcast %36 : vector<1x176xf32> to vector<8x176xf32>
    %38 = arith.addf %35, %37 : vector<8x176xf32>
    %cst_33 = arith.constant 0.000000e+00 : f32
    %39 = vector.broadcast %cst_33 : f32 to vector<8x176xf32>
    %40 = arith.maximumf %38, %39 : vector<8x176xf32>
    %41 = arith.truncf %40 : vector<8x176xf32> to vector<8x176xbf16>
    %c0_34 = arith.constant 0 : index
    %c0_35 = arith.constant 0 : index
    %42 = vector.load %arg14[%c0_34, %c0_35] : memref<176x16xbf16, #tpu.memory_space<vmem>>, vector<176x16xbf16>
    %cst_36 = arith.constant dense<0.000000e+00> : vector<8x16xf32>
    %43 = tpu.matmul %41, %42, %cst_36 {dimension_numbers = #tpu.dot_dimension_numbers<[1], [0], [0], [1], [0, 0, 1, 1], [], []>} : vector<8x176xbf16>, vector<176x16xbf16>, vector<8x16xf32> -> vector<8x16xf32>
    %c0_37 = arith.constant 0 : index
    %c0_38 = arith.constant 0 : index
    %44 = vector.load %arg15[%c0_37, %c0_38] : memref<1x16xf32, #tpu.memory_space<vmem>>, vector<1x16xf32>
    %45 = vector.broadcast %44 : vector<1x16xf32> to vector<8x16xf32>
    %46 = arith.addf %43, %45 : vector<8x16xf32>
    %47 = arith.mulf %25, %46 : vector<8x16xf32>
    %cst_39 = arith.constant dense<0.000000e+00> : vector<8xf32>
    %48 = vector.multi_reduction <add>, %47, %cst_39 [1] : vector<8x16xf32> to vector<8xf32>
    %49 = vector.shape_cast %48 : vector<8xf32> to vector<8x1xf32>
    %c0_40 = arith.constant 0 : index
    %c0_41 = arith.constant 0 : index
    %50 = vector.load %arg16[%c0_40, %c0_41] : memref<8x1xf32, #tpu.memory_space<vmem>>, vector<8x1xf32>
    tpu.vector_store %arg16[%c0_40, %c0_41], %49 {strides = array<i32>} : memref<8x1xf32, #tpu.memory_space<vmem>>, vector<8x1xf32>,
    return
  }
  func.func @transform_0(%arg0: i32) -> (i32, i32) {
    %c0_i32 = arith.constant 0 : i32
    %c0_i32_0 = arith.constant 0 : i32
    return %arg0, %c0_i32 : i32, i32
  }
  func.func @transform_1(%arg0: i32) -> (i32, i32) {
    %c0_i32 = arith.constant 0 : i32
    %c0_i32_0 = arith.constant 0 : i32
    return %arg0, %c0_i32 : i32, i32
  }
  func.func @transform_2(%arg0: i32) -> (i32, i32) {
    %c0_i32 = arith.constant 0 : i32
    %c0_i32_0 = arith.constant 0 : i32
    %c0_i32_1 = arith.constant 0 : i32
    return %c0_i32, %c0_i32_0 : i32, i32
  }
  func.func @transform_3(%arg0: i32) -> (i32, i32) {
    %c0_i32 = arith.constant 0 : i32
    %c0_i32_0 = arith.constant 0 : i32
    %c0_i32_1 = arith.constant 0 : i32
    return %c0_i32, %c0_i32_0 : i32, i32
  }
  func.func @transform_4(%arg0: i32) -> (i32, i32) {
    %c0_i32 = arith.constant 0 : i32
    %c0_i32_0 = arith.constant 0 : i32
    %c0_i32_1 = arith.constant 0 : i32
    return %c0_i32, %c0_i32_0 : i32, i32
  }
  func.func @transform_5(%arg0: i32) -> (i32, i32) {
    %c0_i32 = arith.constant 0 : i32
    %c0_i32_0 = arith.constant 0 : i32
    %c0_i32_1 = arith.constant 0 : i32
    return %c0_i32, %c0_i32_0 : i32, i32
  }
  func.func @transform_6(%arg0: i32) -> (i32, i32) {
    %c0_i32 = arith.constant 0 : i32
    %c0_i32_0 = arith.constant 0 : i32
    %c0_i32_1 = arith.constant 0 : i32
    return %c0_i32, %c0_i32_0 : i32, i32
  }
  func.func @transform_7(%arg0: i32) -> (i32, i32) {
    %c0_i32 = arith.constant 0 : i32
    %c0_i32_0 = arith.constant 0 : i32
    %c0_i32_1 = arith.constant 0 : i32
    return %c0_i32, %c0_i32_0 : i32, i32
  }
  func.func @transform_8(%arg0: i32) -> (i32, i32) {
    %c0_i32 = arith.constant 0 : i32
    %c0_i32_0 = arith.constant 0 : i32
    %c0_i32_1 = arith.constant 0 : i32
    return %c0_i32, %c0_i32_0 : i32, i32
  }
  func.func @transform_9(%arg0: i32) -> (i32, i32) {
    %c0_i32 = arith.constant 0 : i32
    %c0_i32_0 = arith.constant 0 : i32
    %c0_i32_1 = arith.constant 0 : i32
    return %c0_i32, %c0_i32_0 : i32, i32
  }
  func.func @transform_10(%arg0: i32) -> (i32, i32) {
    %c0_i32 = arith.constant 0 : i32
    %c0_i32_0 = arith.constant 0 : i32
    %c0_i32_1 = arith.constant 0 : i32
    return %c0_i32, %c0_i32_0 : i32, i32
  }
  func.func @transform_11(%arg0: i32) -> (i32, i32) {
    %c0_i32 = arith.constant 0 : i32
    %c0_i32_0 = arith.constant 0 : i32
    %c0_i32_1 = arith.constant 0 : i32
    return %c0_i32, %c0_i32_0 : i32, i32
  }
  func.func @transform_12(%arg0: i32) -> (i32, i32) {
    %c0_i32 = arith.constant 0 : i32
    %c0_i32_0 = arith.constant 0 : i32
    %c0_i32_1 = arith.constant 0 : i32
    return %c0_i32, %c0_i32_0 : i32, i32
  }
  func.func @transform_13(%arg0: i32) -> (i32, i32) {
    %c0_i32 = arith.constant 0 : i32
    %c0_i32_0 = arith.constant 0 : i32
    %c0_i32_1 = arith.constant 0 : i32
    return %c0_i32, %c0_i32_0 : i32, i32
  }
  func.func @transform_14(%arg0: i32) -> (i32, i32) {
    %c0_i32 = arith.constant 0 : i32
    %c0_i32_0 = arith.constant 0 : i32
    %c0_i32_1 = arith.constant 0 : i32
    return %c0_i32, %c0_i32_0 : i32, i32
  }
  func.func @transform_15(%arg0: i32) -> (i32, i32) {
    %c0_i32 = arith.constant 0 : i32
    %c0_i32_0 = arith.constant 0 : i32
    return %arg0, %c0_i32 : i32, i32
  }
}

</mosaic_0001>

<llo_original>
// kernel: bvn_critic_forward.1
$region0: #{bvn_critic_forward.1}
  #allocation0 [shape = 'u32[]', space=smem, size = 0x4, offset = 0x4, fixed_abs, tag = 'smem constant byte address 0x4 - core index']
  #allocation1 [shape = 'u32[144,128]{1,0:T(1,128)}', space=vmem, size = 0x12000, scoped, tag = 'internal scratch']
  %s0 = inlined_call_operand.vmem [shape: bf16[8,13], index: 0, kind: input, shape index: {}]
  %s1 = inlined_call_operand.vmem [shape: bf16[8,4], index: 1, kind: input, shape index: {}]
  %s2 = inlined_call_operand.vmem [shape: bf16[13,176], index: 2, kind: input, shape index: {}]
  %s3 = inlined_call_operand.vmem [shape: bf16[4,176], index: 3, kind: input, shape index: {}]
  %s4 = inlined_call_operand.vmem [shape: f32[1,176], index: 4, kind: input, shape index: {}]
  %s5 = inlined_call_operand.vmem [shape: bf16[176,176], index: 5, kind: input, shape index: {}]
  %s6 = inlined_call_operand.vmem [shape: f32[1,176], index: 6, kind: input, shape index: {}]
  %s7 = inlined_call_operand.vmem [shape: bf16[176,16], index: 7, kind: input, shape index: {}]
  %s8 = inlined_call_operand.vmem [shape: f32[1,16], index: 8, kind: input, shape index: {}]
  %s9 = inlined_call_operand.vmem [shape: bf16[13,176], index: 9, kind: input, shape index: {}]
  %s10 = inlined_call_operand.vmem [shape: f32[1,176], index: 10, kind: input, shape index: {}]
  %s11 = inlined_call_operand.vmem [shape: bf16[176,176], index: 11, kind: input, shape index: {}]
  %s12 = inlined_call_operand.vmem [shape: f32[1,176], index: 12, kind: input, shape index: {}]
  %s13 = inlined_call_operand.vmem [shape: bf16[176,16], index: 13, kind: input, shape index: {}]
  %s14 = inlined_call_operand.vmem [shape: f32[1,16], index: 14, kind: input, shape index: {}]
  %s15 = inlined_call_operand.vmem [shape: f32[8,1], index: 15, kind: output, shape index: {}]
  %s16 = sld [smem:[#allocation0]]
  $region70: #{bvn_critic_forward.1} parent=0
    _
  %s18 = ssub.s32 1, %s16
  %s19 = scalar_select 0, %s18, %s16
  // Predicated region
  $region2: #{bvn_critic_forward.1} parent=0 // pred_check
    _
  $region3: #{bvn_critic_forward.1} parent=0 // pred_check_branch
    %21 = sbr.rel (0) target = $region5
  $region4: #{bvn_critic_forward.1} parent=0 // pred_region
    _
  $region5: #{bvn_critic_forward.1} parent=0 // pred_fallthru
    _
  // Predicated region
  $region6: #{bvn_critic_forward.1} parent=0 // pred_check
    _
  $region7: #{bvn_critic_forward.1} parent=0 // pred_check_branch
    %23 = sbr.rel (0) target = $region9
  $region8: #{bvn_critic_forward.1} parent=0 // pred_region
    _
  $region9: #{bvn_critic_forward.1} parent=0 // pred_fallthru
    _
  // Predicated region
  $region10: #{bvn_critic_forward.1} parent=0 // pred_check
    _
  $region11: #{bvn_critic_forward.1} parent=0 // pred_check_branch
    %25 = sbr.rel (0) target = $region13
  $region12: #{bvn_critic_forward.1} parent=0 // pred_region
    _
  $region13: #{bvn_critic_forward.1} parent=0 // pred_fallthru
    _
  // Predicated region
  $region14: #{bvn_critic_forward.1} parent=0 // pred_check
    _
  $region15: #{bvn_critic_forward.1} parent=0 // pred_check_branch
    %27 = sbr.rel (0) target = $region17
  $region16: #{bvn_critic_forward.1} parent=0 // pred_region
    _
  $region17: #{bvn_critic_forward.1} parent=0 // pred_fallthru
    _
  // Predicated region
  $region18: #{bvn_critic_forward.1} parent=0 // pred_check
    _
  $region19: #{bvn_critic_forward.1} parent=0 // pred_check_branch
    %29 = sbr.rel (0) target = $region21
  $region20: #{bvn_critic_forward.1} parent=0 // pred_region
    _
  $region21: #{bvn_critic_forward.1} parent=0 // pred_fallthru
    _
  // Predicated region
  $region22: #{bvn_critic_forward.1} parent=0 // pred_check
    _
  $region23: #{bvn_critic_forward.1} parent=0 // pred_check_branch
    %31 = sbr.rel (0) target = $region25
  $region24: #{bvn_critic_forward.1} parent=0 // pred_region
    _
  $region25: #{bvn_critic_forward.1} parent=0 // pred_fallthru
    _
  // Predicated region
  $region26: #{bvn_critic_forward.1} parent=0 // pred_check
    _
  $region27: #{bvn_critic_forward.1} parent=0 // pred_check_branch
    %33 = sbr.rel (0) target = $region29
  $region28: #{bvn_critic_forward.1} parent=0 // pred_region
    _
  $region29: #{bvn_critic_forward.1} parent=0 // pred_fallthru
    _
  // Predicated region
  $region30: #{bvn_critic_forward.1} parent=0 // pred_check
    _
  $region31: #{bvn_critic_forward.1} parent=0 // pred_check_branch
    %35 = sbr.rel (0) target = $region33
  $region32: #{bvn_critic_forward.1} parent=0 // pred_region
    _
  $region33: #{bvn_critic_forward.1} parent=0 // pred_fallthru
    _
  // Predicated region
  $region34: #{bvn_critic_forward.1} parent=0 // pred_check
    _
  $region35: #{bvn_critic_forward.1} parent=0 // pred_check_branch
    %37 = sbr.rel (0) target = $region37
  $region36: #{bvn_critic_forward.1} parent=0 // pred_region
    _
  $region37: #{bvn_critic_forward.1} parent=0 // pred_fallthru
    _
  // Predicated region
  $region38: #{bvn_critic_forward.1} parent=0 // pred_check
    _
  $region39: #{bvn_critic_forward.1} parent=0 // pred_check_branch
    %39 = sbr.rel (0) target = $region41
  $region40: #{bvn_critic_forward.1} parent=0 // pred_region
    _
  $region41: #{bvn_critic_forward.1} parent=0 // pred_fallthru
    _
  // Predicated region
  $region42: #{bvn_critic_forward.1} parent=0 // pred_check
    _
  $region43: #{bvn_critic_forward.1} parent=0 // pred_check_branch
    %41 = sbr.rel (0) target = $region45
  $region44: #{bvn_critic_forward.1} parent=0 // pred_region
    _
  $region45: #{bvn_critic_forward.1} parent=0 // pred_fallthru
    _
  // Predicated region
  $region46: #{bvn_critic_forward.1} parent=0 // pred_check
    _
  $region47: #{bvn_critic_forward.1} parent=0 // pred_check_branch
    %43 = sbr.rel (0) target = $region49
  $region48: #{bvn_critic_forward.1} parent=0 // pred_region
    _
  $region49: #{bvn_critic_forward.1} parent=0 // pred_fallthru
    _
  // Predicated region
  $region50: #{bvn_critic_forward.1} parent=0 // pred_check
    _
  $region51: #{bvn_critic_forward.1} parent=0 // pred_check_branch
    %45 = sbr.rel (0) target = $region53
  $region52: #{bvn_critic_forward.1} parent=0 // pred_region
    _
  $region53: #{bvn_critic_forward.1} parent=0 // pred_fallthru
    _
  // Predicated region
  $region54: #{bvn_critic_forward.1} parent=0 // pred_check
    _
  $region55: #{bvn_critic_forward.1} parent=0 // pred_check_branch
    %47 = sbr.rel (0) target = $region57
  $region56: #{bvn_critic_forward.1} parent=0 // pred_region
    _
  $region57: #{bvn_critic_forward.1} parent=0 // pred_fallthru
    _
  // Predicated region
  $region58: #{bvn_critic_forward.1} parent=0 // pred_check
    _
  $region59: #{bvn_critic_forward.1} parent=0 // pred_check_branch
    %49 = sbr.rel (0) target = $region61
  $region60: #{bvn_critic_forward.1} parent=0 // pred_region
    _
  $region61: #{bvn_critic_forward.1} parent=0 // pred_fallthru
    _
  %v51 = vld [vmem:[%s0] sm:$0xf]
  %v52 = vld [vmem:[%s1] sm:$0xf]
  %v53 = vld [vmem:[%s2] sm:$0xff]
  %v54 = vld [vmem:[%s2 + $0x8] sm:$0x77]
  %v55 = vld [vmem:[%s3] sm:$0xf]
  %v58 = vunpack.c.l.s4 1983009808
  %v59 = vunpack.c.0.s8 %v58
  %v60 = vlaneseq
  %v61 = vshrl.u32 %v60, 7
  %v62 = vsub.s32 %v59, %v61
  %v63 = vrot.slane %v55, %v62
  %v64 = vcombine.high %v63, %v63
  %vm65 = vcmask 31744
  %v67 = vsel %vm65, %v52, 0
  %vm69 = vcmask 1041408
  %v71 = vsel %vm69, %v63, 0
  %v74 = vsel %vm69, %v64, 0
  %76 = vmatprep.subr.bf16.mxu0 0
  %77 = vmatpush1.bf16.msra.mxu0 0
  %78 = vmatprep.subr.bf16.mxu0 0
  %79 = vmatpush1.bf16.msra.mxu0 0
  %80 = vmatprep.subr.bf16.mxu0 0
  %81 = vmatpush1.bf16.msra.mxu0 0
  %82 = vmatprep.subr.bf16.mxu0 0
  %83 = vmatpush1.bf16.msra.mxu0 0
  %84 = vmatprep.subr.bf16.mxu0 0
  %85 = vmatpush1.bf16.msra.mxu0 0
  %86 = vmatprep.subr.bf16.mxu0 0
  %87 = vmatpush1.bf16.msra.mxu0 0
  %88 = vmatprep.subr.bf16.mxu0 0
  %89 = vmatpush1.bf16.msra.mxu0 0
  %90 = vmatprep.subr.bf16.mxu0 %v74
  %91 = vmatpush1.bf16.msra.mxu0 %v71
  %92 = vmatprep.subr.bf16.mxu0 0
  %93 = vmatpush2.bf16.msra.mxu0 0
  %94 = vmatprep.subr.bf16.mxu0 0
  %95 = vmatpush2.bf16.msra.mxu0 0
  %96 = vmatprep.subr.bf16.mxu0 0
  %97 = vmatpush2.bf16.msra.mxu0 0
  %98 = vmatprep.subr.bf16.mxu0 0
  %99 = vmatpush2.bf16.msra.mxu0 0
  %100 = vmatprep.subr.bf16.mxu0 0
  %101 = vmatpush2.bf16.msra.mxu0 0
  %102 = vmatprep.subr.bf16.mxu0 0
  %103 = vmatpush2.bf16.msra.mxu0 0
  %104 = vmatprep.subr.bf16.mxu0 0
  %105 = vmatpush2.bf16.msra.mxu0 0
  %106 = vmatprep.subr.bf16.mxu0 0
  %107 = vmatpush2.bf16.msra.mxu0 0
  %108 = vmatprep.mubr.bf16.mxu0 0
  %109 = vmatmul.mubr.bf16.gmra.mxu0 %v67
  %v110 = vpop.f32.mrf.mxu0
  %v111 = vadd.f32 0.0, %v110
  %v112 = vpop.f32.mrf.mxu0
  %v113 = vadd.f32 0.0, %v112
  %v114 = vpop.f32.mrf.mxu0
  %v115 = vpop.f32.mrf.mxu0
  %116 = vdwg.mxu0
  %v119 = vunpack.c.l.b16 %v53
  %v120 = vunpack.c.h.b16 %v53
  %v121 = vunpack.c.l.b16 %v54
  %v122 = vunpack.c.h.b16 %v54
  %v123 = vpack.c.b16 %v121, %v119
  %v124 = vpack.c.b16 %v122, %v120
  %vm125 = vcmask 105472
  %v127 = vsel %vm125, %v51, 0
  %vm129 = vcmask 1045504
  %vm130 = vcmask 1046528
  %v131 = vsel %vm129, 4294967295, 65535
  %v132 = vsel %vm130, %v131, 0
  %v134 = vand.u32 %v123, %v132
  %v137 = vand.u32 %v124, %v132
  %139 = vmatprep.subr.bf16.mxu0 0
  %140 = vmatpush1.bf16.msra.mxu0 0
  %141 = vmatprep.subr.bf16.mxu0 0
  %142 = vmatpush1.bf16.msra.mxu0 0
  %143 = vmatprep.subr.bf16.mxu0 0
  %144 = vmatpush1.bf16.msra.mxu0 0
  %145 = vmatprep.subr.bf16.mxu0 0
  %146 = vmatpush1.bf16.msra.mxu0 0
  %147 = vmatprep.subr.bf16.mxu0 0
  %148 = vmatpush1.bf16.msra.mxu0 0
  %149 = vmatprep.subr.bf16.mxu0 0
  %150 = vmatpush1.bf16.msra.mxu0 0
  %151 = vmatprep.subr.bf16.mxu0 0
  %152 = vmatpush1.bf16.msra.mxu0 0
  %153 = vmatprep.subr.bf16.mxu0 %v137
  %154 = vmatpush1.bf16.msra.mxu0 %v134
  %155 = vmatprep.subr.bf16.mxu0 0
  %156 = vmatpush2.bf16.msra.mxu0 0
  %157 = vmatprep.subr.bf16.mxu0 0
  %158 = vmatpush2.bf16.msra.mxu0 0
  %159 = vmatprep.subr.bf16.mxu0 0
  %160 = vmatpush2.bf16.msra.mxu0 0
  %161 = vmatprep.subr.bf16.mxu0 0
  %162 = vmatpush2.bf16.msra.mxu0 0
  %163 = vmatprep.subr.bf16.mxu0 0
  %164 = vmatpush2.bf16.msra.mxu0 0
  %165 = vmatprep.subr.bf16.mxu0 0
  %166 = vmatpush2.bf16.msra.mxu0 0
  %167 = vmatprep.subr.bf16.mxu0 0
  %168 = vmatpush2.bf16.msra.mxu0 0
  %169 = vmatprep.subr.bf16.mxu0 0
  %170 = vmatpush2.bf16.msra.mxu0 0
  %171 = vmatprep.mubr.bf16.mxu0 0
  %172 = vmatmul.mubr.bf16.gmra.mxu0 %v127
  %v173 = vpop.f32.mrf.mxu0
  %v174 = vadd.f32 %v111, %v173
  %v175 = vpop.f32.mrf.mxu0
  %v176 = vadd.f32 %v113, %v175
  %v177 = vpop.f32.mrf.mxu0
  %v178 = vpop.f32.mrf.mxu0
  %179 = vdwg.mxu0
  %v180 = vld [vmem:[%s4] sm:$0x3]
  %v182 = vlaneseq
  %v183 = vshrl.u32 %v182, 7
  %v184 = vsub.s32 0, %v183
  %v185 = vrot.slane %v180, %v184
  %v186 = vlaneseq
  %v187 = vshrl.u32 %v186, 7
  %v188 = vsub.s32 1, %v187
  %v189 = vrot.slane %v180, %v188
  %v192 = vadd.f32 %v174, %v185
  %v193 = vadd.f32 %v176, %v189
  %v194 = vmax.f32 %v192, 0.0
  %v195 = vmax.f32 %v193, 0.0
  %v196 = vpack.c.bf16 %v194, %v194
  %v197 = vpack.c.bf16 %v195, %v195
  %v198 = vld [vmem:[%s5] sm:$0xff]
  %v199 = vld [vmem:[%s5 + $0x8] sm:$0xff]
  %v200 = vld [vmem:[%s5 + $0x10] sm:$0xff]
  %v201 = vld [vmem:[%s5 + $0x18] sm:$0xff]
  %v202 = vld [vmem:[%s5 + $0x20] sm:$0xff]
  %v203 = vld [vmem:[%s5 + $0x28] sm:$0xff]
  %v204 = vld [vmem:[%s5 + $0x30] sm:$0xff]
  %v205 = vld [vmem:[%s5 + $0x38] sm:$0xff]
  %v206 = vld [vmem:[%s5 + $0x40] sm:$0xff]
  %v207 = vld [vmem:[%s5 + $0x48] sm:$0xff]
  %v208 = vld [vmem:[%s5 + $0x50] sm:$0xff]
  %v209 = vld [vmem:[%s5 + $0x58] sm:$0xff]
  %v210 = vld [vmem:[%s5 + $0x60] sm:$0xff]
  %v211 = vld [vmem:[%s5 + $0x68] sm:$0xff]
  %v212 = vld [vmem:[%s5 + $0x70] sm:$0xff]
  %v213 = vld [vmem:[%s5 + $0x78] sm:$0xff]
  %v214 = vld [vmem:[%s5 + $0x80] sm:$0xff]
  %v215 = vld [vmem:[%s5 + $0x88] sm:$0xff]
  %v216 = vld [vmem:[%s5 + $0x90] sm:$0xff]
  %v217 = vld [vmem:[%s5 + $0x98] sm:$0xff]
  %v218 = vld [vmem:[%s5 + $0xa0] sm:$0xff]
  %v219 = vld [vmem:[%s5 + $0xa8] sm:$0xff]
  %v220 = vld [vmem:[%s6] sm:$0x3]
  %v222 = vlaneseq
  %v223 = vshrl.u32 %v222, 7
  %v224 = vsub.s32 0, %v223
  %v225 = vrot.slane %v220, %v224
  %v226 = vlaneseq
  %v227 = vshrl.u32 %v226, 7
  %v228 = vsub.s32 1, %v227
  %v229 = vrot.slane %v220, %v228
  %v254 = vunpack.c.l.b16 %v198
  %v255 = vunpack.c.h.b16 %v198
  %v256 = vunpack.c.l.b16 %v199
  %v257 = vunpack.c.h.b16 %v199
  %v258 = vunpack.c.l.b16 %v200
  %v259 = vunpack.c.h.b16 %v200
  %v260 = vunpack.c.l.b16 %v201
  %v261 = vunpack.c.h.b16 %v201
  %v262 = vunpack.c.l.b16 %v202
  %v263 = vunpack.c.h.b16 %v202
  %v264 = vunpack.c.l.b16 %v203
  %v265 = vunpack.c.h.b16 %v203
  %v266 = vunpack.c.l.b16 %v204
  %v267 = vunpack.c.h.b16 %v204
  %v268 = vunpack.c.l.b16 %v205
  %v269 = vunpack.c.h.b16 %v205
  %v270 = vunpack.c.l.b16 %v206
  %v271 = vunpack.c.h.b16 %v206
  %v272 = vunpack.c.l.b16 %v207
  %v273 = vunpack.c.h.b16 %v207
  %v274 = vunpack.c.l.b16 %v208
  %v275 = vunpack.c.h.b16 %v208
  %v276 = vunpack.c.l.b16 %v209
  %v277 = vunpack.c.h.b16 %v209
  %v278 = vunpack.c.l.b16 %v210
  %v279 = vunpack.c.h.b16 %v210
  %v280 = vunpack.c.l.b16 %v211
  %v281 = vunpack.c.h.b16 %v211
  %v282 = vunpack.c.l.b16 %v212
  %v283 = vunpack.c.h.b16 %v212
  %v284 = vunpack.c.l.b16 %v213
  %v285 = vunpack.c.h.b16 %v213
  %v286 = vunpack.c.l.b16 %v214
  %v287 = vunpack.c.h.b16 %v214
  %v288 = vunpack.c.l.b16 %v215
  %v289 = vunpack.c.h.b16 %v215
  %v290 = vunpack.c.l.b16 %v216
  %v291 = vunpack.c.h.b16 %v216
  %v292 = vunpack.c.l.b16 %v217
  %v293 = vunpack.c.h.b16 %v217
  %v294 = vunpack.c.l.b16 %v218
  %v295 = vunpack.c.h.b16 %v218
  %v296 = vunpack.c.l.b16 %v219
  %v297 = vunpack.c.h.b16 %v219
  %v298 = vpack.c.b16 %v256, %v254
  %v299 = vpack.c.b16 %v257, %v255
  %v300 = vpack.c.b16 %v260, %v258
  %v301 = vpack.c.b16 %v261, %v259
  %v302 = vpack.c.b16 %v264, %v262
  %v303 = vpack.c.b16 %v265, %v263
  %v304 = vpack.c.b16 %v268, %v266
  %v305 = vpack.c.b16 %v269, %v267
  %v306 = vpack.c.b16 %v272, %v270
  %v307 = vpack.c.b16 %v273, %v271
  %v308 = vpack.c.b16 %v276, %v274
  %v309 = vpack.c.b16 %v277, %v275
  %v310 = vpack.c.b16 %v280, %v278
  %v311 = vpack.c.b16 %v281, %v279
  %v312 = vpack.c.b16 %v284, %v282
  %v313 = vpack.c.b16 %v285, %v283
  %v314 = vpack.c.b16 %v288, %v286
  %v315 = vpack.c.b16 %v289, %v287
  %v316 = vpack.c.b16 %v292, %v290
  %v317 = vpack.c.b16 %v293, %v291
  %v318 = vpack.c.b16 %v296, %v294
  %v319 = vpack.c.b16 %v297, %v295
  %vm342 = vcmask 392192
  %v344 = vsel %vm342, %v197, 0
  %346 = vmatprep.subr.bf16.mxu0 %v313
  %347 = vmatpush1.bf16.msra.mxu0 %v312
  %348 = vmatprep.subr.bf16.mxu0 %v311
  %349 = vmatpush1.bf16.msra.mxu0 %v310
  %350 = vmatprep.subr.bf16.mxu0 %v309
  %351 = vmatpush1.bf16.msra.mxu0 %v308
  %352 = vmatprep.subr.bf16.mxu0 %v307
  %353 = vmatpush1.bf16.msra.mxu0 %v306
  %354 = vmatprep.subr.bf16.mxu0 %v305
  %355 = vmatpush1.bf16.msra.mxu0 %v304
  %356 = vmatprep.subr.bf16.mxu0 %v303
  %357 = vmatpush1.bf16.msra.mxu0 %v302
  %358 = vmatprep.subr.bf16.mxu0 %v301
  %359 = vmatpush1.bf16.msra.mxu0 %v300
  %360 = vmatprep.subr.bf16.mxu0 %v299
  %361 = vmatpush1.bf16.msra.mxu0 %v298
  %362 = vmatprep.subr.bf16.mxu0 0
  %363 = vmatpush2.bf16.msra.mxu0 0
  %364 = vmatprep.subr.bf16.mxu0 0
  %365 = vmatpush2.bf16.msra.mxu0 0
  %366 = vmatprep.subr.bf16.mxu0 0
  %367 = vmatpush2.bf16.msra.mxu0 0
  %368 = vmatprep.subr.bf16.mxu0 0
  %369 = vmatpush2.bf16.msra.mxu0 0
  %370 = vmatprep.subr.bf16.mxu0 0
  %371 = vmatpush2.bf16.msra.mxu0 0
  %372 = vmatprep.subr.bf16.mxu0 %v319
  %373 = vmatpush2.bf16.msra.mxu0 %v318
  %374 = vmatprep.subr.bf16.mxu0 %v317
  %375 = vmatpush2.bf16.msra.mxu0 %v316
  %376 = vmatprep.subr.bf16.mxu0 %v315
  %377 = vmatpush2.bf16.msra.mxu0 %v314
  %378 = vmatprep.mubr.bf16.mxu0 %v344
  %379 = vmatmul.mubr.bf16.gmra.mxu0 %v196
  %v380 = vpop.f32.mrf.mxu0
  %v381 = vadd.f32 %v225, %v380
  %v382 = vpop.f32.mrf.mxu0
  %v383 = vadd.f32 %v229, %v382
  %v384 = vpop.f32.mrf.mxu0
  %v385 = vpop.f32.mrf.mxu0
  %386 = vdwg.mxu0
  %v387 = vmax.f32 %v381, 0.0
  %v388 = vmax.f32 %v383, 0.0
  %v389 = vpack.c.bf16 %v387, %v387
  %v390 = vpack.c.bf16 %v388, %v388
  %v391 = vld [vmem:[%s7] sm:$0xf]
  %v392 = vld [vmem:[%s7 + $0x4] sm:$0xf]
  %v393 = vld [vmem:[%s7 + $0x8] sm:$0xf]
  %v394 = vld [vmem:[%s7 + $0xc] sm:$0xf]
  %v395 = vld [vmem:[%s7 + $0x10] sm:$0xf]
  %v396 = vld [vmem:[%s7 + $0x14] sm:$0xf]
  %v397 = vld [vmem:[%s7 + $0x18] sm:$0xf]
  %v398 = vld [vmem:[%s7 + $0x1c] sm:$0xf]
  %v399 = vld [vmem:[%s7 + $0x20] sm:$0xf]
  %v400 = vld [vmem:[%s7 + $0x24] sm:$0xf]
  %v401 = vld [vmem:[%s7 + $0x28] sm:$0xf]
  %v402 = vld [vmem:[%s7 + $0x2c] sm:$0xf]
  %v403 = vld [vmem:[%s7 + $0x30] sm:$0xf]
  %v404 = vld [vmem:[%s7 + $0x34] sm:$0xf]
  %v405 = vld [vmem:[%s7 + $0x38] sm:$0xf]
  %v406 = vld [vmem:[%s7 + $0x3c] sm:$0xf]
  %v407 = vld [vmem:[%s7 + $0x40] sm:$0xf]
  %v408 = vld [vmem:[%s7 + $0x44] sm:$0xf]
  %v409 = vld [vmem:[%s7 + $0x48] sm:$0xf]
  %v410 = vld [vmem:[%s7 + $0x4c] sm:$0xf]
  %v411 = vld [vmem:[%s7 + $0x50] sm:$0xf]
  %v412 = vld [vmem:[%s7 + $0x54] sm:$0xf]
  %v413 = vld [vmem:[%s8] sm:$0x1]
  %v415 = vlaneseq
  %v416 = vshrl.u32 %v415, 7
  %v417 = vsub.s32 0, %v416
  %v418 = vrot.slane %v413, %v417
  %v442 = vunpack.c.l.b16 %v391
  %v443 = vunpack.c.l.b16 %v392
  %v444 = vunpack.c.l.b16 %v393
  %v445 = vunpack.c.l.b16 %v394
  %v446 = vunpack.c.l.b16 %v395
  %v447 = vunpack.c.l.b16 %v396
  %v448 = vunpack.c.l.b16 %v397
  %v449 = vunpack.c.l.b16 %v398
  %v450 = vunpack.c.l.b16 %v399
  %v451 = vunpack.c.l.b16 %v400
  %v452 = vunpack.c.l.b16 %v401
  %v453 = vunpack.c.l.b16 %v402
  %v454 = vunpack.c.l.b16 %v403
  %v455 = vunpack.c.l.b16 %v404
  %v456 = vunpack.c.l.b16 %v405
  %v457 = vunpack.c.l.b16 %v406
  %v458 = vunpack.c.l.b16 %v407
  %v459 = vunpack.c.l.b16 %v408
  %v460 = vunpack.c.l.b16 %v409
  %v461 = vunpack.c.l.b16 %v410
  %v462 = vunpack.c.l.b16 %v411
  %v463 = vunpack.c.l.b16 %v412
  %v464 = vpack.c.b16 %v443, %v442
  %v465 = vpack.c.b16 %v445, %v444
  %v466 = vpack.c.b16 %v447, %v446
  %v467 = vpack.c.b16 %v449, %v448
  %v468 = vpack.c.b16 %v451, %v450
  %v469 = vpack.c.b16 %v453, %v452
  %v470 = vpack.c.b16 %v455, %v454
  %v471 = vpack.c.b16 %v457, %v456
  %v472 = vpack.c.b16 %v459, %v458
  %v473 = vpack.c.b16 %v461, %v460
  %v474 = vpack.c.b16 %v463, %v462
  %v487 = vsel %vm342, %v390, 0
  %489 = vmatprep.subr.bf16.mxu0 0
  %490 = vmatpush1.bf16.msra.mxu0 %v471
  %491 = vmatprep.subr.bf16.mxu0 0
  %492 = vmatpush1.bf16.msra.mxu0 %v470
  %493 = vmatprep.subr.bf16.mxu0 0
  %494 = vmatpush1.bf16.msra.mxu0 %v469
  %495 = vmatprep.subr.bf16.mxu0 0
  %496 = vmatpush1.bf16.msra.mxu0 %v468
  %497 = vmatprep.subr.bf16.mxu0 0
  %498 = vmatpush1.bf16.msra.mxu0 %v467
  %499 = vmatprep.subr.bf16.mxu0 0
  %500 = vmatpush1.bf16.msra.mxu0 %v466
  %501 = vmatprep.subr.bf16.mxu0 0
  %502 = vmatpush1.bf16.msra.mxu0 %v465
  %503 = vmatprep.subr.bf16.mxu0 0
  %504 = vmatpush1.bf16.msra.mxu0 %v464
  %505 = vmatprep.subr.bf16.mxu0 0
  %506 = vmatpush2.bf16.msra.mxu0 0
  %507 = vmatprep.subr.bf16.mxu0 0
  %508 = vmatpush2.bf16.msra.mxu0 0
  %509 = vmatprep.subr.bf16.mxu0 0
  %510 = vmatpush2.bf16.msra.mxu0 0
  %511 = vmatprep.subr.bf16.mxu0 0
  %512 = vmatpush2.bf16.msra.mxu0 0
  %513 = vmatprep.subr.bf16.mxu0 0
  %514 = vmatpush2.bf16.msra.mxu0 0
  %515 = vmatprep.subr.bf16.mxu0 0
  %516 = vmatpush2.bf16.msra.mxu0 %v474
  %517 = vmatprep.subr.bf16.mxu0 0
  %518 = vmatpush2.bf16.msra.mxu0 %v473
  %519 = vmatprep.subr.bf16.mxu0 0
  %520 = vmatpush2.bf16.msra.mxu0 %v472
  %521 = vmatprep.mubr.bf16.mxu0 %v487
  %522 = vmatmul.mubr.bf16.gmra.mxu0 %v389
  %v523 = vpop.f32.mrf.mxu0
  %v524 = vadd.f32 %v418, %v523
  %v525 = vpop.f32.mrf.mxu0
  %v526 = vpop.f32.mrf.mxu0
  %v527 = vpop.f32.mrf.mxu0
  %528 = vdwg.mxu0
  %v529 = vld [vmem:[%s9] sm:$0xff]
  %v530 = vld [vmem:[%s9 + $0x8] sm:$0x77]
  %v531 = vld [vmem:[%s10] sm:$0x3]
  %v533 = vlaneseq
  %v534 = vshrl.u32 %v533, 7
  %v535 = vsub.s32 0, %v534
  %v536 = vrot.slane %v531, %v535
  %v537 = vlaneseq
  %v538 = vshrl.u32 %v537, 7
  %v539 = vsub.s32 1, %v538
  %v540 = vrot.slane %v531, %v539
  %v545 = vunpack.c.l.b16 %v529
  %v546 = vunpack.c.h.b16 %v529
  %v547 = vunpack.c.l.b16 %v530
  %v548 = vunpack.c.h.b16 %v530
  %v549 = vpack.c.b16 %v547, %v545
  %v550 = vpack.c.b16 %v548, %v546
  %v552 = vand.u32 %v549, %v132
  %v555 = vand.u32 %v550, %v132
  %557 = vmatprep.subr.bf16.mxu0 0
  %558 = vmatpush1.bf16.msra.mxu0 0
  %559 = vmatprep.subr.bf16.mxu0 0
  %560 = vmatpush1.bf16.msra.mxu0 0
  %561 = vmatprep.subr.bf16.mxu0 0
  %562 = vmatpush1.bf16.msra.mxu0 0
  %563 = vmatprep.subr.bf16.mxu0 0
  %564 = vmatpush1.bf16.msra.mxu0 0
  %565 = vmatprep.subr.bf16.mxu0 0
  %566 = vmatpush1.bf16.msra.mxu0 0
  %567 = vmatprep.subr.bf16.mxu0 0
  %568 = vmatpush1.bf16.msra.mxu0 0
  %569 = vmatprep.subr.bf16.mxu0 0
  %570 = vmatpush1.bf16.msra.mxu0 0
  %571 = vmatprep.subr.bf16.mxu0 %v555
  %572 = vmatpush1.bf16.msra.mxu0 %v552
  %573 = vmatprep.subr.bf16.mxu0 0
  %574 = vmatpush2.bf16.msra.mxu0 0
  %575 = vmatprep.subr.bf16.mxu0 0
  %576 = vmatpush2.bf16.msra.mxu0 0
  %577 = vmatprep.subr.bf16.mxu0 0
  %578 = vmatpush2.bf16.msra.mxu0 0
  %579 = vmatprep.subr.bf16.mxu0 0
  %580 = vmatpush2.bf16.msra.mxu0 0
  %581 = vmatprep.subr.bf16.mxu0 0
  %582 = vmatpush2.bf16.msra.mxu0 0
  %583 = vmatprep.subr.bf16.mxu0 0
  %584 = vmatpush2.bf16.msra.mxu0 0
  %585 = vmatprep.subr.bf16.mxu0 0
  %586 = vmatpush2.bf16.msra.mxu0 0
  %587 = vmatprep.subr.bf16.mxu0 0
  %588 = vmatpush2.bf16.msra.mxu0 0
  %589 = vmatprep.mubr.bf16.mxu0 0
  %590 = vmatmul.mubr.bf16.gmra.mxu0 %v127
  %v591 = vpop.f32.mrf.mxu0
  %v592 = vadd.f32 %v536, %v591
  %v593 = vpop.f32.mrf.mxu0
  %v594 = vadd.f32 %v540, %v593
  %v595 = vpop.f32.mrf.mxu0
  %v596 = vpop.f32.mrf.mxu0
  %597 = vdwg.mxu0
  %v598 = vmax.f32 %v592, 0.0
  %v599 = vmax.f32 %v594, 0.0
  %v600 = vpack.c.bf16 %v598, %v598
  %v601 = vpack.c.bf16 %v599, %v599
  %v602 = vld [vmem:[%s11] sm:$0xff]
  %v603 = vld [vmem:[%s11 + $0x8] sm:$0xff]
  %v604 = vld [vmem:[%s11 + $0x10] sm:$0xff]
  %v605 = vld [vmem:[%s11 + $0x18] sm:$0xff]
  %v606 = vld [vmem:[%s11 + $0x20] sm:$0xff]
  %v607 = vld [vmem:[%s11 + $0x28] sm:$0xff]
  %v608 = vld [vmem:[%s11 + $0x30] sm:$0xff]
  %v609 = vld [vmem:[%s11 + $0x38] sm:$0xff]
  %v610 = vld [vmem:[%s11 + $0x40] sm:$0xff]
  %v611 = vld [vmem:[%s11 + $0x48] sm:$0xff]
  %v612 = vld [vmem:[%s11 + $0x50] sm:$0xff]
  %v613 = vld [vmem:[%s11 + $0x58] sm:$0xff]
  %v614 = vld [vmem:[%s11 + $0x60] sm:$0xff]
  %v615 = vld [vmem:[%s11 + $0x68] sm:$0xff]
  %v616 = vld [vmem:[%s11 + $0x70] sm:$0xff]
  %v617 = vld [vmem:[%s11 + $0x78] sm:$0xff]
  %v618 = vld [vmem:[%s11 + $0x80] sm:$0xff]
  %v619 = vld [vmem:[%s11 + $0x88] sm:$0xff]
  %v620 = vld [vmem:[%s11 + $0x90] sm:$0xff]
  %v621 = vld [vmem:[%s11 + $0x98] sm:$0xff]
  %v622 = vld [vmem:[%s11 + $0xa0] sm:$0xff]
  %v623 = vld [vmem:[%s11 + $0xa8] sm:$0xff]
  %v624 = vld [vmem:[%s12] sm:$0x3]
  %v626 = vlaneseq
  %v627 = vshrl.u32 %v626, 7
  %v628 = vsub.s32 0, %v627
  %v629 = vrot.slane %v624, %v628
  %v630 = vlaneseq
  %v631 = vshrl.u32 %v630, 7
  %v632 = vsub.s32 1, %v631
  %v633 = vrot.slane %v624, %v632
  %v658 = vunpack.c.l.b16 %v602
  %v659 = vunpack.c.h.b16 %v602
  %v660 = vunpack.c.l.b16 %v603
  %v661 = vunpack.c.h.b16 %v603
  %v662 = vunpack.c.l.b16 %v604
  %v663 = vunpack.c.h.b16 %v604
  %v664 = vunpack.c.l.b16 %v605
  %v665 = vunpack.c.h.b16 %v605
  %v666 = vunpack.c.l.b16 %v606
  %v667 = vunpack.c.h.b16 %v606
  %v668 = vunpack.c.l.b16 %v607
  %v669 = vunpack.c.h.b16 %v607
  %v670 = vunpack.c.l.b16 %v608
  %v671 = vunpack.c.h.b16 %v608
  %v672 = vunpack.c.l.b16 %v609
  %v673 = vunpack.c.h.b16 %v609
  %v674 = vunpack.c.l.b16 %v610
  %v675 = vunpack.c.h.b16 %v610
  %v676 = vunpack.c.l.b16 %v611
  %v677 = vunpack.c.h.b16 %v611
  %v678 = vunpack.c.l.b16 %v612
  %v679 = vunpack.c.h.b16 %v612
  %v680 = vunpack.c.l.b16 %v613
  %v681 = vunpack.c.h.b16 %v613
  %v682 = vunpack.c.l.b16 %v614
  %v683 = vunpack.c.h.b16 %v614
  %v684 = vunpack.c.l.b16 %v615
  %v685 = vunpack.c.h.b16 %v615
  %v686 = vunpack.c.l.b16 %v616
  %v687 = vunpack.c.h.b16 %v616
  %v688 = vunpack.c.l.b16 %v617
  %v689 = vunpack.c.h.b16 %v617
  %v690 = vunpack.c.l.b16 %v618
  %v691 = vunpack.c.h.b16 %v618
  %v692 = vunpack.c.l.b16 %v619
  %v693 = vunpack.c.h.b16 %v619
  %v694 = vunpack.c.l.b16 %v620
  %v695 = vunpack.c.h.b16 %v620
  %v696 = vunpack.c.l.b16 %v621
  %v697 = vunpack.c.h.b16 %v621
  %v698 = vunpack.c.l.b16 %v622
  %v699 = vunpack.c.h.b16 %v622
  %v700 = vunpack.c.l.b16 %v623
  %v701 = vunpack.c.h.b16 %v623
  %v702 = vpack.c.b16 %v660, %v658
  %v703 = vpack.c.b16 %v661, %v659
  %v704 = vpack.c.b16 %v664, %v662
  %v705 = vpack.c.b16 %v665, %v663
  %v706 = vpack.c.b16 %v668, %v666
  %v707 = vpack.c.b16 %v669, %v667
  %v708 = vpack.c.b16 %v672, %v670
  %v709 = vpack.c.b16 %v673, %v671
  %v710 = vpack.c.b16 %v676, %v674
  %v711 = vpack.c.b16 %v677, %v675
  %v712 = vpack.c.b16 %v680, %v678
  %v713 = vpack.c.b16 %v681, %v679
  %v714 = vpack.c.b16 %v684, %v682
  %v715 = vpack.c.b16 %v685, %v683
  %v716 = vpack.c.b16 %v688, %v686
  %v717 = vpack.c.b16 %v689, %v687
  %v718 = vpack.c.b16 %v692, %v690
  %v719 = vpack.c.b16 %v693, %v691
  %v720 = vpack.c.b16 %v696, %v694
  %v721 = vpack.c.b16 %v697, %v695
  %v722 = vpack.c.b16 %v700, %v698
  %v723 = vpack.c.b16 %v701, %v699
  %v747 = vsel %vm342, %v601, 0
  %749 = vmatprep.subr.bf16.mxu0 %v717
  %750 = vmatpush1.bf16.msra.mxu0 %v716
  %751 = vmatprep.subr.bf16.mxu0 %v715
  %752 = vmatpush1.bf16.msra.mxu0 %v714
  %753 = vmatprep.subr.bf16.mxu0 %v713
  %754 = vmatpush1.bf16.msra.mxu0 %v712
  %755 = vmatprep.subr.bf16.mxu0 %v711
  %756 = vmatpush1.bf16.msra.mxu0 %v710
  %757 = vmatprep.subr.bf16.mxu0 %v709
  %758 = vmatpush1.bf16.msra.mxu0 %v708
  %759 = vmatprep.subr.bf16.mxu0 %v707
  %760 = vmatpush1.bf16.msra.mxu0 %v706
  %761 = vmatprep.subr.bf16.mxu0 %v705
  %762 = vmatpush1.bf16.msra.mxu0 %v704
  %763 = vmatprep.subr.bf16.mxu0 %v703
  %764 = vmatpush1.bf16.msra.mxu0 %v702
  %765 = vmatprep.subr.bf16.mxu0 0
  %766 = vmatpush2.bf16.msra.mxu0 0
  %767 = vmatprep.subr.bf16.mxu0 0
  %768 = vmatpush2.bf16.msra.mxu0 0
  %769 = vmatprep.subr.bf16.mxu0 0
  %770 = vmatpush2.bf16.msra.mxu0 0
  %771 = vmatprep.subr.bf16.mxu0 0
  %772 = vmatpush2.bf16.msra.mxu0 0
  %773 = vmatprep.subr.bf16.mxu0 0
  %774 = vmatpush2.bf16.msra.mxu0 0
  %775 = vmatprep.subr.bf16.mxu0 %v723
  %776 = vmatpush2.bf16.msra.mxu0 %v722
  %777 = vmatprep.subr.bf16.mxu0 %v721
  %778 = vmatpush2.bf16.msra.mxu0 %v720
  %779 = vmatprep.subr.bf16.mxu0 %v719
  %780 = vmatpush2.bf16.msra.mxu0 %v718
  %781 = vmatprep.mubr.bf16.mxu0 %v747
  %782 = vmatmul.mubr.bf16.gmra.mxu0 %v600
  %v783 = vpop.f32.mrf.mxu0
  %v784 = vadd.f32 %v629, %v783
  %v785 = vpop.f32.mrf.mxu0
  %v786 = vadd.f32 %v633, %v785
  %v787 = vpop.f32.mrf.mxu0
  %v788 = vpop.f32.mrf.mxu0
  %789 = vdwg.mxu0
  %v790 = vmax.f32 %v784, 0.0
  %v791 = vmax.f32 %v786, 0.0
  %v792 = vpack.c.bf16 %v790, %v790
  %v793 = vpack.c.bf16 %v791, %v791
  %v794 = vld [vmem:[%s13] sm:$0xf]
  %v795 = vld [vmem:[%s13 + $0x4] sm:$0xf]
  %v796 = vld [vmem:[%s13 + $0x8] sm:$0xf]
  %v797 = vld [vmem:[%s13 + $0xc] sm:$0xf]
  %v798 = vld [vmem:[%s13 + $0x10] sm:$0xf]
  %v799 = vld [vmem:[%s13 + $0x14] sm:$0xf]
  %v800 = vld [vmem:[%s13 + $0x18] sm:$0xf]
  %v801 = vld [vmem:[%s13 + $0x1c] sm:$0xf]
  %v802 = vld [vmem:[%s13 + $0x20] sm:$0xf]
  %v803 = vld [vmem:[%s13 + $0x24] sm:$0xf]
  %v804 = vld [vmem:[%s13 + $0x28] sm:$0xf]
  %v805 = vld [vmem:[%s13 + $0x2c] sm:$0xf]
  %v806 = vld [vmem:[%s13 + $0x30] sm:$0xf]
  %v807 = vld [vmem:[%s13 + $0x34] sm:$0xf]
  %v808 = vld [vmem:[%s13 + $0x38] sm:$0xf]
  %v809 = vld [vmem:[%s13 + $0x3c] sm:$0xf]
  %v810 = vld [vmem:[%s13 + $0x40] sm:$0xf]
  %v811 = vld [vmem:[%s13 + $0x44] sm:$0xf]
  %v812 = vld [vmem:[%s13 + $0x48] sm:$0xf]
  %v813 = vld [vmem:[%s13 + $0x4c] sm:$0xf]
  %v814 = vld [vmem:[%s13 + $0x50] sm:$0xf]
  %v815 = vld [vmem:[%s13 + $0x54] sm:$0xf]
  %v816 = vld [vmem:[%s14] sm:$0x1]
  %v818 = vlaneseq
  %v819 = vshrl.u32 %v818, 7
  %v820 = vsub.s32 0, %v819
  %v821 = vrot.slane %v816, %v820
  %v845 = vunpack.c.l.b16 %v794
  %v846 = vunpack.c.l.b16 %v795
  %v847 = vunpack.c.l.b16 %v796
  %v848 = vunpack.c.l.b16 %v797
  %v849 = vunpack.c.l.b16 %v798
  %v850 = vunpack.c.l.b16 %v799
  %v851 = vunpack.c.l.b16 %v800
  %v852 = vunpack.c.l.b16 %v801
  %v853 = vunpack.c.l.b16 %v802
  %v854 = vunpack.c.l.b16 %v803
  %v855 = vunpack.c.l.b16 %v804
  %v856 = vunpack.c.l.b16 %v805
  %v857 = vunpack.c.l.b16 %v806
  %v858 = vunpack.c.l.b16 %v807
  %v859 = vunpack.c.l.b16 %v808
  %v860 = vunpack.c.l.b16 %v809
  %v861 = vunpack.c.l.b16 %v810
  %v862 = vunpack.c.l.b16 %v811
  %v863 = vunpack.c.l.b16 %v812
  %v864 = vunpack.c.l.b16 %v813
  %v865 = vunpack.c.l.b16 %v814
  %v866 = vunpack.c.l.b16 %v815
  %v867 = vpack.c.b16 %v846, %v845
  %v868 = vpack.c.b16 %v848, %v847
  %v869 = vpack.c.b16 %v850, %v849
  %v870 = vpack.c.b16 %v852, %v851
  %v871 = vpack.c.b16 %v854, %v853
  %v872 = vpack.c.b16 %v856, %v855
  %v873 = vpack.c.b16 %v858, %v857
  %v874 = vpack.c.b16 %v860, %v859
  %v875 = vpack.c.b16 %v862, %v861
  %v876 = vpack.c.b16 %v864, %v863
  %v877 = vpack.c.b16 %v866, %v865
  %v890 = vsel %vm342, %v793, 0
  %892 = vmatprep.subr.bf16.mxu0 0
  %893 = vmatpush1.bf16.msra.mxu0 %v874
  %894 = vmatprep.subr.bf16.mxu0 0
  %895 = vmatpush1.bf16.msra.mxu0 %v873
  %896 = vmatprep.subr.bf16.mxu0 0
  %897 = vmatpush1.bf16.msra.mxu0 %v872
  %898 = vmatprep.subr.bf16.mxu0 0
  %899 = vmatpush1.bf16.msra.mxu0 %v871
  %900 = vmatprep.subr.bf16.mxu0 0
  %901 = vmatpush1.bf16.msra.mxu0 %v870
  %902 = vmatprep.subr.bf16.mxu0 0
  %903 = vmatpush1.bf16.msra.mxu0 %v869
  %904 = vmatprep.subr.bf16.mxu0 0
  %905 = vmatpush1.bf16.msra.mxu0 %v868
  %906 = vmatprep.subr.bf16.mxu0 0
  %907 = vmatpush1.bf16.msra.mxu0 %v867
  %908 = vmatprep.subr.bf16.mxu0 0
  %909 = vmatpush2.bf16.msra.mxu0 0
  %910 = vmatprep.subr.bf16.mxu0 0
  %911 = vmatpush2.bf16.msra.mxu0 0
  %912 = vmatprep.subr.bf16.mxu0 0
  %913 = vmatpush2.bf16.msra.mxu0 0
  %914 = vmatprep.subr.bf16.mxu0 0
  %915 = vmatpush2.bf16.msra.mxu0 0
  %916 = vmatprep.subr.bf16.mxu0 0
  %917 = vmatpush2.bf16.msra.mxu0 0
  %918 = vmatprep.subr.bf16.mxu0 0
  %919 = vmatpush2.bf16.msra.mxu0 %v877
  %920 = vmatprep.subr.bf16.mxu0 0
  %921 = vmatpush2.bf16.msra.mxu0 %v876
  %922 = vmatprep.subr.bf16.mxu0 0
  %923 = vmatpush2.bf16.msra.mxu0 %v875
  %924 = vmatprep.mubr.bf16.mxu0 %v890
  %925 = vmatmul.mubr.bf16.gmra.mxu0 %v792
  %v926 = vpop.f32.mrf.mxu0
  %v927 = vadd.f32 %v821, %v926
  %v928 = vpop.f32.mrf.mxu0
  %v929 = vpop.f32.mrf.mxu0
  %v930 = vpop.f32.mrf.mxu0
  %931 = vdwg.mxu0
  %v932 = vmul.f32 %v524, %v927
  %vm933 = vcmask 130048
  %v934 = vsel %vm933, %v932, 0.0
  %935 = vadd.xlane.f32.xlu0 %v934
  %v936 = vpop.xlane.xlu0 %935
  %vm937 = vcmask 7168
  %938 = vst.msk [vmem:[%s15] sm:$0xff] %vm937, %v936
  // Predicated region
  $region62: #{bvn_critic_forward.1} parent=0 // pred_check
    _
  $region63: #{bvn_critic_forward.1} parent=0 // pred_check_branch
    %940 = sbr.rel (0) target = $region65
  $region64: #{bvn_critic_forward.1} parent=0 // pred_region
    _
  $region65: #{bvn_critic_forward.1} parent=0 // pred_fallthru
    _
  // Predicated region
  $region66: #{bvn_critic_forward.1} parent=0 // pred_check
    _
  $region67: #{bvn_critic_forward.1} parent=0 // pred_check_branch
    %942 = sbr.rel (0) target = $region69
  $region68: #{bvn_critic_forward.1} parent=0 // pred_region
    _
  $region69: #{bvn_critic_forward.1} parent=0 // pred_fallthru
    _

</llo_original>
